<compile_context>
chip_gen: v6e
topology: v6e:2x2x1
jax: 0.10.0
libtpu: 0.0.40
codegen_flags: <defaults>
</compile_context>

<pallas_src>
import functools

import jax
import jax.numpy as jnp
from jax.experimental import pallas as pl
from jax.experimental.pallas import tpu as pltpu

# Small, forward-consistent shapes
BATCH = 16
BRANCH_DIM = 16
TRUNK_DIM = 8
WIDTH = 32
IN_DIM = BRANCH_DIM + TRUNK_DIM          # 24
FUSED = 2 * WIDTH                        # 64 (branch lanes 0:32, trunk lanes 32:64)


def _round_up(n, m):
    return ((n + m - 1) // m) * m


def _block_diag(a, b):
    m, n = a.shape
    p, q = b.shape
    top = jnp.concatenate([a, jnp.zeros((m, q), a.dtype)], axis=1)
    bot = jnp.concatenate([jnp.zeros((p, n), b.dtype), b], axis=1)
    return jnp.concatenate([top, bot], axis=0)


def deeponet_kernel(x_ref, w1_ref, b1_ref, w2_ref, b2_ref, bias_ref, o_ref):
    x = x_ref[...]                                            # [TB, 24]

    # ---- fused layer 1: [branch | trunk] in one MXU pass, relu both halves ----
    h = jnp.dot(x, w1_ref[...], preferred_element_type=jnp.float32) + b1_ref[...]
    h = jnp.maximum(h, 0.0)                                   # [TB, 64]

    # ---- fused layer 2: relu only the trunk half (branch's last linear has no act) ----
    h = jnp.dot(h, w2_ref[...], preferred_element_type=jnp.float32) + b2_ref[...]
    lane = jax.lax.broadcasted_iota(jnp.int32, h.shape, dimension=1)
    h = jnp.where(lane >= WIDTH, jnp.maximum(h, 0.0), h)      # [TB, 64]

    # ---- inner product over width (static lane slices) + scalar bias from SMEM ----
    hb = h[:, :WIDTH]
    ht = h[:, WIDTH:FUSED]
    o_ref[...] = jnp.sum(hb * ht, axis=-1, keepdims=True) + bias_ref[0, 0]


@functools.partial(jax.jit, static_argnames=("tb",))
def deeponet_forward(x, params, tb=None):
    B = x.shape[0]
    if tb is None:
        tb = min(512, _round_up(B, 8))
    padded_b = _round_up(B, tb)
    if padded_b != B:
        x = jnp.pad(x, ((0, padded_b - B), (0, 0)))

    # Fuse branch / trunk params into block-diagonal weights (wrapper-side, XLA).
    w1 = _block_diag(params["wb1"], params["wt1"])                      # [24, 64]
    b1 = jnp.concatenate([params["bb1"], params["bt1"]], axis=1)        # [1, 64]
    w2 = _block_diag(params["wb2"], params["wt2"])                      # [64, 64]
    b2 = jnp.concatenate([params["bb2"], params["bt2"]], axis=1)        # [1, 64]
    bias = params["bias"].reshape(1, 1)                                 # [1, 1] -> SMEM

    grid = (padded_b // tb,)
    out = pl.pallas_call(
        deeponet_kernel,
        out_shape=jax.ShapeDtypeStruct((padded_b, 1), jnp.float32),
        grid=grid,
        in_specs=[
            pl.BlockSpec((tb, IN_DIM), lambda i: (i, 0)),               # x: streamed per block
            pl.BlockSpec((IN_DIM, FUSED), lambda i: (0, 0)),            # weights resident
            pl.BlockSpec((1, FUSED), lambda i: (0, 0)),
            pl.BlockSpec((FUSED, FUSED), lambda i: (0, 0)),
            pl.BlockSpec((1, FUSED), lambda i: (0, 0)),
            pl.BlockSpec(memory_space=pltpu.MemorySpace.SMEM),          # scalar bias
        ],
        out_specs=pl.BlockSpec((tb, 1), lambda i: (i, 0)),
        compiler_params=pltpu.CompilerParams(
            dimension_semantics=("parallel",),                          # 2 TCs on v7x
        ),
    )(x, w1, b1, w2, b2, bias)
    return out[:B]


def init_params(key):
    """Deterministic parameter init (PyTorch-Linear-style uniform fan-in)."""
    def linear(key, fan_in, fan_out):
        kw, kb = jax.random.split(key)
        bound = 1.0 / jnp.sqrt(jnp.float32(fan_in))
        w = jax.random.uniform(kw, (fan_in, fan_out), jnp.float32, -bound, bound)
        b = jax.random.uniform(kb, (1, fan_out), jnp.float32, -bound, bound)
        return w, b

    keys = jax.random.split(key, 4)
    wb1, bb1 = linear(keys[0], BRANCH_DIM, WIDTH)   # BrLinM1
    wb2, bb2 = linear(keys[1], WIDTH, WIDTH)        # BrLinM2 (final branch linear, no act)
    wt1, bt1 = linear(keys[2], TRUNK_DIM, WIDTH)    # TrLinM1
    wt2, bt2 = linear(keys[3], WIDTH, WIDTH)        # TrLinM2 (followed by relu)
    bias = jnp.zeros((1, 1), jnp.float32)           # params['bias'] (zeros, like PyTorch)
    return dict(wb1=wb1, bb1=bb1, wb2=wb2, bb2=bb2,
                wt1=wt1, bt1=bt1, wt2=wt2, bt2=bt2, bias=bias)


def deeponet_reference(x, p):
    xb = x[:, :BRANCH_DIM]
    xt = x[:, -TRUNK_DIM:]
    hb = jnp.maximum(xb @ p["wb1"] + p["bb1"], 0.0)
    hb = hb @ p["wb2"] + p["bb2"]
    ht = jnp.maximum(xt @ p["wt1"] + p["bt1"], 0.0)
    ht = jnp.maximum(ht @ p["wt2"] + p["bt2"], 0.0)
    return jnp.sum(hb * ht, axis=-1, keepdims=True) + p["bias"][0, 0]


if __name__ == "__main__":
    key = jax.random.PRNGKey(0)
    kx, kp = jax.random.split(key)
    x = jax.random.normal(kx, (BATCH, IN_DIM), jnp.float32)
    params = init_params(kp)

    # tb=8 exercises a 2-step batch grid at this small demo size; at real
    # batch sizes tb grows automatically (up to 512 rows per block).
    out = deeponet_forward(x, params, tb=8)
    out = jax.block_until_ready(out)

    ref = deeponet_reference(x, params)
    assert out.shape == (BATCH, 1)
    assert jnp.allclose(out, ref, atol=1e-5, rtol=1e-5)
    print("KERNEL_OK")
</pallas_src>

<mosaic_0001>
module attributes {stable_mosaic.version = 11 : i64} {
  func.func @deeponet_kernel(%arg0: i32, %arg1: memref<8x24xf32, #tpu.memory_space<vmem>>, %arg2: memref<24x64xf32, #tpu.memory_space<vmem>>, %arg3: memref<1x64xf32, #tpu.memory_space<vmem>>, %arg4: memref<64x64xf32, #tpu.memory_space<vmem>>, %arg5: memref<1x64xf32, #tpu.memory_space<vmem>>, %arg6: memref<1x1xf32, #tpu.memory_space<smem>>, %arg7: memref<8x1xf32, #tpu.memory_space<vmem>>) attributes {dimension_semantics = [#tpu.dimension_semantics<parallel>], iteration_bounds = array<i64: 2>, scalar_prefetch = 0 : i64, scratch_operands = 0 : i64, tpu.core_type = #tpu.core_type<tc>, window_params = [{transform_indices = @transform_0, window_bounds = array<i64: 8, 24>}, {pipeline_mode = #tpu.pipeline_mode<synchronous>, transform_indices = @transform_1, window_bounds = array<i64: 24, 64>}, {pipeline_mode = #tpu.pipeline_mode<synchronous>, transform_indices = @transform_2, window_bounds = array<i64: 1, 64>}, {pipeline_mode = #tpu.pipeline_mode<synchronous>, transform_indices = @transform_3, window_bounds = array<i64: 64, 64>}, {pipeline_mode = #tpu.pipeline_mode<synchronous>, transform_indices = @transform_4, window_bounds = array<i64: 1, 64>}, {transform_indices = @transform_5, window_bounds = array<i64: 1, 1>}, {transform_indices = @transform_6, window_bounds = array<i64: 8, 1>}]} {
    %c0 = arith.constant 0 : index
    %c0_0 = arith.constant 0 : index
    %0 = vector.load %arg1[%c0, %c0_0] : memref<8x24xf32, #tpu.memory_space<vmem>>, vector<8x24xf32>
    %c0_1 = arith.constant 0 : index
    %c0_2 = arith.constant 0 : index
    %1 = vector.load %arg2[%c0_1, %c0_2] : memref<24x64xf32, #tpu.memory_space<vmem>>, vector<24x64xf32>
    %cst = arith.constant dense<0.000000e+00> : vector<8x64xf32>
    %2 = tpu.matmul %0, %1, %cst {dimension_numbers = #tpu.dot_dimension_numbers<[1], [0], [0], [1], [0, 0, 1, 1], [], []>} : vector<8x24xf32>, vector<24x64xf32>, vector<8x64xf32> -> vector<8x64xf32>
    %c0_3 = arith.constant 0 : index
    %c0_4 = arith.constant 0 : index
    %3 = vector.load %arg3[%c0_3, %c0_4] : memref<1x64xf32, #tpu.memory_space<vmem>>, vector<1x64xf32>
    %4 = vector.broadcast %3 : vector<1x64xf32> to vector<8x64xf32>
    %5 = arith.addf %2, %4 : vector<8x64xf32>
    %cst_5 = arith.constant 0.000000e+00 : f32
    %6 = vector.broadcast %cst_5 : f32 to vector<8x64xf32>
    %7 = arith.maximumf %5, %6 : vector<8x64xf32>
    %c0_6 = arith.constant 0 : index
    %c0_7 = arith.constant 0 : index
    %8 = vector.load %arg4[%c0_6, %c0_7] : memref<64x64xf32, #tpu.memory_space<vmem>>, vector<64x64xf32>
    %cst_8 = arith.constant dense<0.000000e+00> : vector<8x64xf32>
    %9 = tpu.matmul %7, %8, %cst_8 {dimension_numbers = #tpu.dot_dimension_numbers<[1], [0], [0], [1], [0, 0, 1, 1], [], []>} : vector<8x64xf32>, vector<64x64xf32>, vector<8x64xf32> -> vector<8x64xf32>
    %c0_9 = arith.constant 0 : index
    %c0_10 = arith.constant 0 : index
    %10 = vector.load %arg5[%c0_9, %c0_10] : memref<1x64xf32, #tpu.memory_space<vmem>>, vector<1x64xf32>
    %11 = vector.broadcast %10 : vector<1x64xf32> to vector<8x64xf32>
    %12 = arith.addf %9, %11 : vector<8x64xf32>
    %13 = tpu.iota {dimensions = array<i32: 1>} : vector<8x64xi32>
    %c32_i32 = arith.constant 32 : i32
    %14 = vector.broadcast %c32_i32 : i32 to vector<8x64xi32>
    %15 = arith.cmpi sge, %13, %14 : vector<8x64xi32>
    %cst_11 = arith.constant 0.000000e+00 : f32
    %16 = vector.broadcast %cst_11 : f32 to vector<8x64xf32>
    %17 = arith.maximumf %12, %16 : vector<8x64xf32>
    %18 = arith.select %15, %17, %12 : vector<8x64xi1>, vector<8x64xf32>
    %19 = vector.extract_strided_slice %18 {offsets = [0, 0], sizes = [8, 32], strides = [1, 1]} : vector<8x64xf32> to vector<8x32xf32>
    %20 = vector.extract_strided_slice %18 {offsets = [0, 32], sizes = [8, 32], strides = [1, 1]} : vector<8x64xf32> to vector<8x32xf32>
    %21 = arith.mulf %19, %20 : vector<8x32xf32>
    %cst_12 = arith.constant dense<0.000000e+00> : vector<8xf32>
    %22 = vector.multi_reduction <add>, %21, %cst_12 [1] : vector<8x32xf32> to vector<8xf32>
    %23 = vector.shape_cast %22 : vector<8xf32> to vector<8x1xf32>
    %c0_13 = arith.constant 0 : index
    %c0_14 = arith.constant 0 : index
    %24 = memref.load %arg6[%c0_13, %c0_14] : memref<1x1xf32, #tpu.memory_space<smem>>
    %25 = vector.broadcast %24 : f32 to vector<8x1xf32>
    %26 = arith.addf %23, %25 : vector<8x1xf32>
    %c0_15 = arith.constant 0 : index
    %c0_16 = arith.constant 0 : index
    %27 = vector.load %arg7[%c0_15, %c0_16] : memref<8x1xf32, #tpu.memory_space<vmem>>, vector<8x1xf32>
    tpu.vector_store %arg7[%c0_15, %c0_16], %26 {strides = array<i32>} : memref<8x1xf32, #tpu.memory_space<vmem>>, vector<8x1xf32>,
    return
  }
  func.func @transform_0(%arg0: i32) -> (i32, i32) {
    %c0_i32 = arith.constant 0 : i32
    %c0_i32_0 = arith.constant 0 : i32
    return %arg0, %c0_i32 : i32, i32
  }
  func.func @transform_1(%arg0: i32) -> (i32, i32) {
    %c0_i32 = arith.constant 0 : i32
    %c0_i32_0 = arith.constant 0 : i32
    %c0_i32_1 = arith.constant 0 : i32
    return %c0_i32, %c0_i32_0 : i32, i32
  }
  func.func @transform_2(%arg0: i32) -> (i32, i32) {
    %c0_i32 = arith.constant 0 : i32
    %c0_i32_0 = arith.constant 0 : i32
    %c0_i32_1 = arith.constant 0 : i32
    return %c0_i32, %c0_i32_0 : i32, i32
  }
  func.func @transform_3(%arg0: i32) -> (i32, i32) {
    %c0_i32 = arith.constant 0 : i32
    %c0_i32_0 = arith.constant 0 : i32
    %c0_i32_1 = arith.constant 0 : i32
    return %c0_i32, %c0_i32_0 : i32, i32
  }
  func.func @transform_4(%arg0: i32) -> (i32, i32) {
    %c0_i32 = arith.constant 0 : i32
    %c0_i32_0 = arith.constant 0 : i32
    %c0_i32_1 = arith.constant 0 : i32
    return %c0_i32, %c0_i32_0 : i32, i32
  }
  func.func @transform_5(%arg0: i32) -> (i32, i32) {
    %c0_i32 = arith.constant 0 : i32
    %c0_i32_0 = arith.constant 0 : i32
    %c0_i32_1 = arith.constant 0 : i32
    return %c0_i32, %c0_i32_0 : i32, i32
  }
  func.func @transform_6(%arg0: i32) -> (i32, i32) {
    %c0_i32 = arith.constant 0 : i32
    %c0_i32_0 = arith.constant 0 : i32
    return %arg0, %c0_i32 : i32, i32
  }
}

</mosaic_0001>

<llo_original>
// kernel: deeponet_forward.1
$region0: #{deeponet_forward.1}
  #allocation0 [shape = 'u32[]', space=smem, size = 0x4, offset = 0x4, fixed_abs, tag = 'smem constant byte address 0x4 - core index']
  #allocation1 [shape = 'u32[144,128]{1,0:T(1,128)}', space=vmem, size = 0x12000, scoped, tag = 'internal scratch']
  #allocation2 [shape = 'f32[1,1]{1,0:T(1,128)S(6)}', space=smem, size = 0x200, scoped, tag = 'scoped memory for deeponet_forward.1']
  %s0 = inlined_call_operand.vmem [shape: f32[16,24], index: 0, kind: input, shape index: {}]
  %s1 = inlined_call_operand.vmem [shape: f32[24,64], index: 1, kind: input, shape index: {}]
  %s2 = inlined_call_operand.vmem [shape: f32[1,64], index: 2, kind: input, shape index: {}]
  %s3 = inlined_call_operand.vmem [shape: f32[64,64], index: 3, kind: input, shape index: {}]
  %s4 = inlined_call_operand.vmem [shape: f32[1,64], index: 4, kind: input, shape index: {}]
  %s5 = inlined_call_operand.<no memory space> [shape: f32[1,1], index: 5, kind: input, shape index: {}]
  %s6 = inlined_call_operand.vmem [shape: f32[16,1], index: 6, kind: output, shape index: {}]
  %s7 = sld [smem:[#allocation0]]
  $region57: #{deeponet_forward.1} parent=0
    _
  %s9 = ssub.s32 1, %s7
  %s10 = scalar_select 0, %s9, %s7
  %11 = sst [smem:[#allocation2]] %s5
  loop: start=0, step=1, limit=4
  $region2: #{deeponet_forward.1} parent=0 // loop_pre_header
    _
  $region3: #{deeponet_forward.1} parent=0 // loop_header
    %s13 = sphi 0, %s17
    %p14 = scmp.ge.s32.totalorder %s13, 4
    %s23 = sphi 0, %s25
    %s26 = sphi 0, %s23
    %s27 = sphi 0, %s26
    %s43 = sphi 0, %s27
    %s47 = sphi 0, %s47
    %s49 = sphi 0, %s47
    %s50 = sphi 0, %s49
    %s64 = sphi 0, %s50
    %s68 = sphi 0, %s68
    %s70 = sphi 0, %s68
    %s71 = sphi 0, %s70
    %s85 = sphi 0, %s71
    %s89 = sphi 0, %s89
    %s91 = sphi 0, %s89
    %s92 = sphi 0, %s91
    %s106 = sphi 0, %s92
    %s110 = sphi 0, %s110
    %s112 = sphi 0, %s110
    %s113 = sphi 0, %s112
    %s127 = sphi 0, %s113
    %s131 = sphi 0, %s131
    %s133 = sphi 0, %s131
    %s134 = sphi 0, %s133
    %s148 = sphi 0, %s134
    %s154 = sphi 0, %s156
    %s157 = sphi 0, %s154
    %s158 = sphi 0, %s157
    %s174 = sphi 0, %s158
  $region4: #{deeponet_forward.1} parent=0 // loop_header_branch
    %16 = sbr.rel (%p14) target = $region8
  $region5: #{deeponet_forward.1} parent=0 // loop_body
    %s18 = ssub.s32 %s13, 1
    %s19 = ssub.s32 %s13, 2
    %s20 = sadd.s32 %s13, 1
    %s21 = ssub.s32 %s13, %s20
    %p22 = scmp.eq.s32.totalorder %s21, 0
    %s24 = sadd.s32 %s23, 1
    %s25 = scalar_select %p22, %s23, %s24
    %p28 = pneg %p22
    %p29 = scmp.eq.s32.totalorder %s13, 1
    %p30 = por %p28, %p29
    %p31 = scmp.ne.s32.totalorder %s23, %s26
    %p32 = scmp.eq.s32.totalorder %s13, 0
    %p33 = por %p31, %p32
    %p34 = scmp.ne.s32.totalorder %s23, %s26
    %p35 = scmp.eq.s32.totalorder %s18, 1
    %p36 = por %p34, %p35
    %p37 = scmp.ne.s32.totalorder %s26, %s27
    %p38 = scmp.eq.s32.totalorder %s18, 0
    %p39 = por %p37, %p38
    %p40 = scmp.ne.s32.totalorder %s26, %s27
    %p41 = scmp.eq.s32.totalorder %s19, 1
    %p42 = por %p40, %p41
    %p44 = scmp.ne.s32.totalorder %s27, %s43
    %p45 = scmp.eq.s32.totalorder %s19, 0
    %p46 = por %p44, %p45
    %s48 = sadd.s32 %s47, 1
    %p51 = scmp.eq.s32.totalorder %s13, 1
    %p52 = scmp.ne.s32.totalorder %s47, %s49
    %p53 = scmp.eq.s32.totalorder %s13, 0
    %p54 = por %p52, %p53
    %p55 = scmp.ne.s32.totalorder %s47, %s49
    %p56 = scmp.eq.s32.totalorder %s18, 1
    %p57 = por %p55, %p56
    %p58 = scmp.ne.s32.totalorder %s49, %s50
    %p59 = scmp.eq.s32.totalorder %s18, 0
    %p60 = por %p58, %p59
    %p61 = scmp.ne.s32.totalorder %s49, %s50
    %p62 = scmp.eq.s32.totalorder %s19, 1
    %p63 = por %p61, %p62
    %p65 = scmp.ne.s32.totalorder %s50, %s64
    %p66 = scmp.eq.s32.totalorder %s19, 0
    %p67 = por %p65, %p66
    %s69 = sadd.s32 %s68, 1
    %p72 = scmp.eq.s32.totalorder %s13, 1
    %p73 = scmp.ne.s32.totalorder %s68, %s70
    %p74 = scmp.eq.s32.totalorder %s13, 0
    %p75 = por %p73, %p74
    %p76 = scmp.ne.s32.totalorder %s68, %s70
    %p77 = scmp.eq.s32.totalorder %s18, 1
    %p78 = por %p76, %p77
    %p79 = scmp.ne.s32.totalorder %s70, %s71
    %p80 = scmp.eq.s32.totalorder %s18, 0
    %p81 = por %p79, %p80
    %p82 = scmp.ne.s32.totalorder %s70, %s71
    %p83 = scmp.eq.s32.totalorder %s19, 1
    %p84 = por %p82, %p83
    %p86 = scmp.ne.s32.totalorder %s71, %s85
    %p87 = scmp.eq.s32.totalorder %s19, 0
    %p88 = por %p86, %p87
    %s90 = sadd.s32 %s89, 1
    %p93 = scmp.eq.s32.totalorder %s13, 1
    %p94 = scmp.ne.s32.totalorder %s89, %s91
    %p95 = scmp.eq.s32.totalorder %s13, 0
    %p96 = por %p94, %p95
    %p97 = scmp.ne.s32.totalorder %s89, %s91
    %p98 = scmp.eq.s32.totalorder %s18, 1
    %p99 = por %p97, %p98
    %p100 = scmp.ne.s32.totalorder %s91, %s92
    %p101 = scmp.eq.s32.totalorder %s18, 0
    %p102 = por %p100, %p101
    %p103 = scmp.ne.s32.totalorder %s91, %s92
    %p104 = scmp.eq.s32.totalorder %s19, 1
    %p105 = por %p103, %p104
    %p107 = scmp.ne.s32.totalorder %s92, %s106
    %p108 = scmp.eq.s32.totalorder %s19, 0
    %p109 = por %p107, %p108
    %s111 = sadd.s32 %s110, 1
    %p114 = scmp.eq.s32.totalorder %s13, 1
    %p115 = scmp.ne.s32.totalorder %s110, %s112
    %p116 = scmp.eq.s32.totalorder %s13, 0
    %p117 = por %p115, %p116
    %p118 = scmp.ne.s32.totalorder %s110, %s112
    %p119 = scmp.eq.s32.totalorder %s18, 1
    %p120 = por %p118, %p119
    %p121 = scmp.ne.s32.totalorder %s112, %s113
    %p122 = scmp.eq.s32.totalorder %s18, 0
    %p123 = por %p121, %p122
    %p124 = scmp.ne.s32.totalorder %s112, %s113
    %p125 = scmp.eq.s32.totalorder %s19, 1
    %p126 = por %p124, %p125
    %p128 = scmp.ne.s32.totalorder %s113, %s127
    %p129 = scmp.eq.s32.totalorder %s19, 0
    %p130 = por %p128, %p129
    %s132 = sadd.s32 %s131, 1
    %p135 = scmp.eq.s32.totalorder %s13, 1
    %p136 = scmp.ne.s32.totalorder %s131, %s133
    %p137 = scmp.eq.s32.totalorder %s13, 0
    %p138 = por %p136, %p137
    %p139 = scmp.ne.s32.totalorder %s131, %s133
    %p140 = scmp.eq.s32.totalorder %s18, 1
    %p141 = por %p139, %p140
    %p142 = scmp.ne.s32.totalorder %s133, %s134
    %p143 = scmp.eq.s32.totalorder %s18, 0
    %p144 = por %p142, %p143
    %p145 = scmp.ne.s32.totalorder %s133, %s134
    %p146 = scmp.eq.s32.totalorder %s19, 1
    %p147 = por %p145, %p146
    %p149 = scmp.ne.s32.totalorder %s134, %s148
    %p150 = scmp.eq.s32.totalorder %s19, 0
    %p151 = por %p149, %p150
    %s152 = ssub.s32 %s13, %s20
    %p153 = scmp.eq.s32.totalorder %s152, 0
    %s155 = sadd.s32 %s154, 1
    %s156 = scalar_select %p153, %s154, %s155
    %p159 = pneg %p153
    %p160 = scmp.eq.s32.totalorder %s13, 1
    %p161 = por %p159, %p160
    %p162 = scmp.ne.s32.totalorder %s154, %s157
    %p163 = scmp.eq.s32.totalorder %s13, 0
    %p164 = por %p162, %p163
    %p165 = scmp.ne.s32.totalorder %s154, %s157
    %p166 = scmp.eq.s32.totalorder %s18, 1
    %p167 = por %p165, %p166
    %p168 = scmp.ne.s32.totalorder %s157, %s158
    %p169 = scmp.eq.s32.totalorder %s18, 0
    %p170 = por %p168, %p169
    %p171 = scmp.ne.s32.totalorder %s157, %s158
    %p172 = scmp.eq.s32.totalorder %s19, 1
    %p173 = por %p171, %p172
    %p175 = scmp.ne.s32.totalorder %s158, %s174
    %p176 = scmp.eq.s32.totalorder %s19, 0
    %p177 = por %p175, %p176
    %p178 = scmp.le.s32.totalorder 1, %s13
    %p179 = scmp.lt.s32.totalorder %s13, 3
    %p180 = pnand %p178, %p179
    %p181 = pneg %p180
    // Predicated region
    $region9: #{deeponet_forward.1} parent=5 // pred_check
      _
    $region10: #{deeponet_forward.1} parent=5 // pred_check_branch
      %183 = sbr.rel (%p180) target = $region12
    $region11: #{deeponet_forward.1} parent=5 // pred_region
      %s184 = ssub.s32 %s13, 1
      // Predicated region
      $region13: #{deeponet_forward.1} parent=11 // pred_check
        %p185 = pneg %p60
      $region14: #{deeponet_forward.1} parent=11 // pred_check_branch
        %187 = sbr.rel (%p185) target = $region16
      $region15: #{deeponet_forward.1} parent=11 // pred_region
        _
      $region16: #{deeponet_forward.1} parent=11 // pred_fallthru
        _
      // Predicated region
      $region17: #{deeponet_forward.1} parent=11 // pred_check
        %p188 = pneg %p81
      $region18: #{deeponet_forward.1} parent=11 // pred_check_branch
        %190 = sbr.rel (%p188) target = $region20
      $region19: #{deeponet_forward.1} parent=11 // pred_region
        _
      $region20: #{deeponet_forward.1} parent=11 // pred_fallthru
        _
      // Predicated region
      $region21: #{deeponet_forward.1} parent=11 // pred_check
        %p191 = pneg %p102
      $region22: #{deeponet_forward.1} parent=11 // pred_check_branch
        %193 = sbr.rel (%p191) target = $region24
      $region23: #{deeponet_forward.1} parent=11 // pred_region
        _
      $region24: #{deeponet_forward.1} parent=11 // pred_fallthru
        _
      // Predicated region
      $region25: #{deeponet_forward.1} parent=11 // pred_check
        %p194 = pneg %p123
      $region26: #{deeponet_forward.1} parent=11 // pred_check_branch
        %196 = sbr.rel (%p194) target = $region28
      $region27: #{deeponet_forward.1} parent=11 // pred_region
        _
      $region28: #{deeponet_forward.1} parent=11 // pred_fallthru
        _
      // Predicated region
      $region29: #{deeponet_forward.1} parent=11 // pred_check
        %p197 = pneg %p144
      $region30: #{deeponet_forward.1} parent=11 // pred_check_branch
        %199 = sbr.rel (%p197) target = $region32
      $region31: #{deeponet_forward.1} parent=11 // pred_region
        _
      $region32: #{deeponet_forward.1} parent=11 // pred_fallthru
        _
    $region12: #{deeponet_forward.1} parent=5 // pred_fallthru
      _
    %p200 = scmp.lt.s32.totalorder %s13, 2
    // Predicated region
    $region33: #{deeponet_forward.1} parent=5 // pred_check
      %p201 = pneg %p200
    $region34: #{deeponet_forward.1} parent=5 // pred_check_branch
      %203 = sbr.rel (%p201) target = $region36
    $region35: #{deeponet_forward.1} parent=5 // pred_region
      // Predicated region
      $region37: #{deeponet_forward.1} parent=35 // pred_check
        %p204 = pneg %p33
      $region38: #{deeponet_forward.1} parent=35 // pred_check_branch
        %206 = sbr.rel (%p204) target = $region40
      $region39: #{deeponet_forward.1} parent=35 // pred_region
        %p207 = scmp.lt.s32.totalorder %s13, 1
        %s208 = scalar_select %p207, %s13, 1
        %s209 = smul.addr %s208, 8
        %s210 = scalar_lea.vmem %s0, %s209
      $region40: #{deeponet_forward.1} parent=35 // pred_fallthru
        _
    $region36: #{deeponet_forward.1} parent=5 // pred_fallthru
      _
    %p211 = scmp.le.s32.totalorder 1, %s13
    %p212 = scmp.lt.s32.totalorder %s13, 3
    %p213 = pnand %p211, %p212
    %p214 = pneg %p213
    // Predicated region
    $region41: #{deeponet_forward.1} parent=5 // pred_check
      _
    $region42: #{deeponet_forward.1} parent=5 // pred_check_branch
      %216 = sbr.rel (%p213) target = $region44
    $region43: #{deeponet_forward.1} parent=5 // pred_region
      %s217 = ssub.s32 %s13, 1
      %p218 = scmp.lt.s32.totalorder %s18, 1
      %s219 = scalar_select %p218, %s18, 1
      %s220 = smul.addr %s219, 8
      %s221 = scalar_lea.vmem %s0, %s220
      %p222 = pneg %p39
      %p223 = pneg %p36
      %p224 = pneg %p60
      %p225 = pneg %p57
      %p226 = pneg %p81
      %p227 = pneg %p78
      %p228 = pneg %p102
      %p229 = pneg %p99
      %p230 = pneg %p123
      %p231 = pneg %p120
      %p232 = pneg %p144
      %p233 = pneg %p141
      %p234 = pneg %p170
      %p235 = pneg %p167
      %p236 = scmp.lt.s32.totalorder %s18, 1
      %s237 = scalar_select %p236, %s18, 1
      %s238 = smul.addr %s237, 8
      %s239 = scalar_lea.vmem %s6, %s238
      %p240 = scmp.lt.s32.totalorder %s18, 1
      %s241 = scalar_select %p240, %s18, 1
      %s242 = smul.addr %s241, 8
      %s243 = scalar_lea.vmem %s0, %s242
      %p244 = scmp.lt.s32.totalorder %s18, 1
      %s245 = scalar_select %p244, %s18, 1
      %s246 = smul.addr %s245, 8
      %s247 = scalar_lea.vmem %s6, %s246
      %v248 = vld [vmem:[%s243] sm:$0xff]
      %v249 = vld [vmem:[%s1] sm:$0xff]
      %v250 = vld [vmem:[%s1 + $0x8] sm:$0xff]
      %v251 = vld [vmem:[%s1 + $0x10] sm:$0xff]
      %v252 = vld [vmem:[%s2] sm:$0x1]
      %v254 = vlaneseq
      %v255 = vshrl.u32 %v254, 7
      %v256 = vsub.s32 0, %v255
      %v257 = vrot.slane %v252, %v256
      %vm259 = vcmask 195584
      %v261 = vsel %vm259, %v248, 0
      %263 = vmatprep.subr.mxu0 0.0
      %264 = vmatpush1.msra.mxu0 0.0
      %265 = vmatprep.subr.mxu0 0.0
      %266 = vmatpush1.msra.mxu0 0.0
      %267 = vmatprep.subr.mxu0 0.0
      %268 = vmatpush1.msra.mxu0 0.0
      %269 = vmatprep.subr.mxu0 0.0
      %270 = vmatpush1.msra.mxu0 0.0
      %271 = vmatprep.subr.mxu0 0.0
      %272 = vmatpush1.msra.mxu0 0.0
      %273 = vmatprep.subr.mxu0 0.0
      %274 = vmatpush1.msra.mxu0 0.0
      %275 = vmatprep.subr.mxu0 0.0
      %276 = vmatpush1.msra.mxu0 0.0
      %277 = vmatprep.subr.mxu0 0.0
      %278 = vmatpush1.msra.mxu0 0.0
      %279 = vmatprep.subr.mxu0 0.0
      %280 = vmatpush1.msra.mxu0 0.0
      %281 = vmatprep.subr.mxu0 0.0
      %282 = vmatpush1.msra.mxu0 0.0
      %283 = vmatprep.subr.mxu0 0.0
      %284 = vmatpush1.msra.mxu0 0.0
      %285 = vmatprep.subr.mxu0 0.0
      %286 = vmatpush1.msra.mxu0 0.0
      %287 = vmatprep.subr.mxu0 0.0
      %288 = vmatpush1.msra.mxu0 0.0
      %289 = vmatprep.subr.mxu0 0.0
      %290 = vmatpush1.msra.mxu0 %v251
      %291 = vmatprep.subr.mxu0 0.0
      %292 = vmatpush1.msra.mxu0 %v250
      %293 = vmatprep.subr.mxu0 0.0
      %294 = vmatpush1.msra.mxu0 %v249
      %295 = vmatprep.subr.mxu0 0.0
      %296 = vmatpush2.msra.mxu0 0.0
      %297 = vmatprep.subr.mxu0 0.0
      %298 = vmatpush2.msra.mxu0 0.0
      %299 = vmatprep.subr.mxu0 0.0
      %300 = vmatpush2.msra.mxu0 0.0
      %301 = vmatprep.subr.mxu0 0.0
      %302 = vmatpush2.msra.mxu0 0.0
      %303 = vmatprep.subr.mxu0 0.0
      %304 = vmatpush2.msra.mxu0 0.0
      %305 = vmatprep.subr.mxu0 0.0
      %306 = vmatpush2.msra.mxu0 0.0
      %307 = vmatprep.subr.mxu0 0.0
      %308 = vmatpush2.msra.mxu0 0.0
      %309 = vmatprep.subr.mxu0 0.0
      %310 = vmatpush2.msra.mxu0 0.0
      %311 = vmatprep.subr.mxu0 0.0
      %312 = vmatpush2.msra.mxu0 0.0
      %313 = vmatprep.subr.mxu0 0.0
      %314 = vmatpush2.msra.mxu0 0.0
      %315 = vmatprep.subr.mxu0 0.0
      %316 = vmatpush2.msra.mxu0 0.0
      %317 = vmatprep.subr.mxu0 0.0
      %318 = vmatpush2.msra.mxu0 0.0
      %319 = vmatprep.subr.mxu0 0.0
      %320 = vmatpush2.msra.mxu0 0.0
      %321 = vmatprep.subr.mxu0 0.0
      %322 = vmatpush2.msra.mxu0 0.0
      %323 = vmatprep.subr.mxu0 0.0
      %324 = vmatpush2.msra.mxu0 0.0
      %325 = vmatprep.subr.mxu0 0.0
      %326 = vmatpush2.msra.mxu0 0.0
      %327 = vmatprep.mubr.f32.mxu0 0.0
      %328 = vmatmul.mubr.f32.gmra.mxu0 %v261
      %v329 = vpop.f32.mrf.mxu0
      %v330 = vadd.f32 %v257, %v329
      %v331 = vpop.f32.mrf.mxu0
      %332 = vdwg.mxu0
      %v333 = vmax.f32 %v330, 0.0
      %v334 = vld [vmem:[%s3] sm:$0xff]
      %v335 = vld [vmem:[%s3 + $0x8] sm:$0xff]
      %v336 = vld [vmem:[%s3 + $0x10] sm:$0xff]
      %v337 = vld [vmem:[%s3 + $0x18] sm:$0xff]
      %v338 = vld [vmem:[%s3 + $0x20] sm:$0xff]
      %v339 = vld [vmem:[%s3 + $0x28] sm:$0xff]
      %v340 = vld [vmem:[%s3 + $0x30] sm:$0xff]
      %v341 = vld [vmem:[%s3 + $0x38] sm:$0xff]
      %v342 = vld [vmem:[%s4] sm:$0x1]
      %v344 = vlaneseq
      %v345 = vshrl.u32 %v344, 7
      %v346 = vsub.s32 0, %v345
      %v347 = vrot.slane %v342, %v346
      %vm349 = vcmask 523264
      %v351 = vsel %vm349, %v333, 0
      %353 = vmatprep.subr.mxu0 0.0
      %354 = vmatpush1.msra.mxu0 0.0
      %355 = vmatprep.subr.mxu0 0.0
      %356 = vmatpush1.msra.mxu0 0.0
      %357 = vmatprep.subr.mxu0 0.0
      %358 = vmatpush1.msra.mxu0 0.0
      %359 = vmatprep.subr.mxu0 0.0
      %360 = vmatpush1.msra.mxu0 0.0
      %361 = vmatprep.subr.mxu0 0.0
      %362 = vmatpush1.msra.mxu0 0.0
      %363 = vmatprep.subr.mxu0 0.0
      %364 = vmatpush1.msra.mxu0 0.0
      %365 = vmatprep.subr.mxu0 0.0
      %366 = vmatpush1.msra.mxu0 0.0
      %367 = vmatprep.subr.mxu0 0.0
      %368 = vmatpush1.msra.mxu0 0.0
      %369 = vmatprep.subr.mxu0 0.0
      %370 = vmatpush1.msra.mxu0 %v341
      %371 = vmatprep.subr.mxu0 0.0
      %372 = vmatpush1.msra.mxu0 %v340
      %373 = vmatprep.subr.mxu0 0.0
      %374 = vmatpush1.msra.mxu0 %v339
      %375 = vmatprep.subr.mxu0 0.0
      %376 = vmatpush1.msra.mxu0 %v338
      %377 = vmatprep.subr.mxu0 0.0
      %378 = vmatpush1.msra.mxu0 %v337
      %379 = vmatprep.subr.mxu0 0.0
      %380 = vmatpush1.msra.mxu0 %v336
      %381 = vmatprep.subr.mxu0 0.0
      %382 = vmatpush1.msra.mxu0 %v335
      %383 = vmatprep.subr.mxu0 0.0
      %384 = vmatpush1.msra.mxu0 %v334
      %385 = vmatprep.subr.mxu0 0.0
      %386 = vmatpush2.msra.mxu0 0.0
      %387 = vmatprep.subr.mxu0 0.0
      %388 = vmatpush2.msra.mxu0 0.0
      %389 = vmatprep.subr.mxu0 0.0
      %390 = vmatpush2.msra.mxu0 0.0
      %391 = vmatprep.subr.mxu0 0.0
      %392 = vmatpush2.msra.mxu0 0.0
      %393 = vmatprep.subr.mxu0 0.0
      %394 = vmatpush2.msra.mxu0 0.0
      %395 = vmatprep.subr.mxu0 0.0
      %396 = vmatpush2.msra.mxu0 0.0
      %397 = vmatprep.subr.mxu0 0.0
      %398 = vmatpush2.msra.mxu0 0.0
      %399 = vmatprep.subr.mxu0 0.0
      %400 = vmatpush2.msra.mxu0 0.0
      %401 = vmatprep.subr.mxu0 0.0
      %402 = vmatpush2.msra.mxu0 0.0
      %403 = vmatprep.subr.mxu0 0.0
      %404 = vmatpush2.msra.mxu0 0.0
      %405 = vmatprep.subr.mxu0 0.0
      %406 = vmatpush2.msra.mxu0 0.0
      %407 = vmatprep.subr.mxu0 0.0
      %408 = vmatpush2.msra.mxu0 0.0
      %409 = vmatprep.subr.mxu0 0.0
      %410 = vmatpush2.msra.mxu0 0.0
      %411 = vmatprep.subr.mxu0 0.0
      %412 = vmatpush2.msra.mxu0 0.0
      %413 = vmatprep.subr.mxu0 0.0
      %414 = vmatpush2.msra.mxu0 0.0
      %415 = vmatprep.subr.mxu0 0.0
      %416 = vmatpush2.msra.mxu0 0.0
      %417 = vmatprep.mubr.f32.mxu0 0.0
      %418 = vmatmul.mubr.f32.gmra.mxu0 %v351
      %v419 = vpop.f32.mrf.mxu0
      %v420 = vadd.f32 %v347, %v419
      %v421 = vpop.f32.mrf.mxu0
      %422 = vdwg.mxu0
      %v423 = vlaneseq
      %v424 = vand.u32 %v423, 127
      %vm425 = vcmp.ge.s32.totalorder %v424, 32
      %v426 = vmax.f32 %v420, 0.0
      %v427 = vsel %vm425, %v426, %v420
      %429 = vrot.lane.b32.xlu0 %v427, 96
      %v430 = vpop.permute.xlu0 %429
      %v432 = vmul.f32 %v427, %v430
      %vm433 = vcmask 261120
      %v434 = vsel %vm433, %v432, 0.0
      %435 = vadd.xlane.f32.xlu0 %v434
      %v436 = vpop.xlane.xlu0 %435
      %s437 = sld [smem:[#allocation2]]
      %v438 = vstv %s437
      %v439 = vadd.f32 %v436, %v438
      %vm440 = vcmask 7168
      %441 = vst.msk [vmem:[%s247] sm:$0xff] %vm440, %v439
      %p442 = scmp.lt.s32.totalorder %s18, 1
      %s443 = scalar_select %p442, %s18, 1
      %s444 = smul.addr %s443, 8
      %s445 = scalar_lea.vmem %s6, %s444
      // Predicated region
      $region45: #{deeponet_forward.1} parent=43 // pred_check
        %p446 = pneg %p167
      $region46: #{deeponet_forward.1} parent=43 // pred_check_branch
        %448 = sbr.rel (%p446) target = $region48
      $region47: #{deeponet_forward.1} parent=43 // pred_region
        _
      $region48: #{deeponet_forward.1} parent=43 // pred_fallthru
        _
    $region44: #{deeponet_forward.1} parent=5 // pred_fallthru
      _
    %p449 = scmp.le.s32.totalorder 2, %s13
    // Predicated region
    $region49: #{deeponet_forward.1} parent=5 // pred_check
      %p450 = pneg %p449
    $region50: #{deeponet_forward.1} parent=5 // pred_check_branch
      %452 = sbr.rel (%p450) target = $region52
    $region51: #{deeponet_forward.1} parent=5 // pred_region
      %s453 = ssub.s32 %s13, 2
      // Predicated region
      $region53: #{deeponet_forward.1} parent=51 // pred_check
        %p454 = pneg %p173
      $region54: #{deeponet_forward.1} parent=51 // pred_check_branch
        %456 = sbr.rel (%p454) target = $region56
      $region55: #{deeponet_forward.1} parent=51 // pred_region
        %p457 = scmp.lt.s32.totalorder %s19, 1
        %s458 = scalar_select %p457, %s19, 1
        %s459 = smul.addr %s458, 8
        %s460 = scalar_lea.vmem %s6, %s459
      $region56: #{deeponet_forward.1} parent=51 // pred_fallthru
        _
    $region52: #{deeponet_forward.1} parent=5 // pred_fallthru
      _
  $region6: #{deeponet_forward.1} parent=0 // loop_footer
    %s17 = sadd.s32 1, %s13
  $region7: #{deeponet_forward.1} parent=0 // loop_footer_branch
    %12 = sbr.rel target = $region3
  $region8: #{deeponet_forward.1} parent=0 // loop_exit
    _

</llo_original>
